<compile_context>
chip_gen: v7x
topology: tpu7x:2x2x1
jax: 0.10.0
libtpu: 0.0.40
codegen_flags: <defaults>
</compile_context>

<pallas_src>
import functools

import jax
import jax.numpy as jnp
import numpy as np
from jax.experimental import pallas as pl
from jax.experimental.pallas import tpu as pltpu

_SUBLANE = 8


def _round_up(x: int, m: int) -> int:
    return ((x + m - 1) // m) * m


def _vmem_limit_bytes() -> int:
    """Generation-aware VMEM limit: 48 MiB on v7x (64 MiB physical), 64 MiB on v5e/v6e."""
    try:
        cap = int(pltpu.get_tpu_info().vmem_capacity_bytes)
    except Exception:
        cap = 128 * 1024 * 1024
    # Leave >= 25% headroom for Mosaic internal scratch / pipeline buffers.
    return min(64 * 1024 * 1024, (3 * cap) // 4)


def _ssm_kernel(x_ref, u_ref, wa_ref, wb_ref, bias_ref, o_ref):
    """One batch tile: res = bias + sum_i x[:,i,:] @ WA_i + sum_j u[:,j,:] @ WB_j."""
    state_order = wa_ref.shape[0]
    action_order = wb_ref.shape[0]

    # f32 accumulator seeded with the (pre-summed) bias; activations may be
    # bf16 (halved HBM bytes) -- the MXU accumulate stays f32 either way.
    acc = jnp.zeros(o_ref.shape, jnp.float32) + bias_ref[...].astype(jnp.float32)
    for i in range(state_order):            # small static order -> unrolled
        acc = acc + jnp.dot(x_ref[:, i, :], wa_ref[i],
                            preferred_element_type=jnp.float32)
    for j in range(action_order):
        acc = acc + jnp.dot(u_ref[:, j, :], wb_ref[j],
                            preferred_element_type=jnp.float32)
    o_ref[...] = acc.astype(o_ref.dtype)


def pack_params(A_w, A_b, B_w, B_b, dtype=jnp.float32):
    """Pack per-order Linear weights once (hoisted off the per-call path).

    A_w: (state_order, state_dim, state_dim)   nn.Linear.weight layout (out, in)
    A_b: (state_order, state_dim)
    B_w: (action_order, state_dim, action_dim)
    B_b: (action_order, state_dim)

    Returns:
      W_A:  (state_order, state_dim, state_dim)   already transposed to (in, out)
      W_B:  (action_order, action_dim, state_dim) already transposed to (in, out)
      bias: (1, state_dim) f32, summed over all orders
    """
    W_A = jnp.transpose(A_w, (0, 2, 1)).astype(dtype)
    W_B = jnp.transpose(B_w, (0, 2, 1)).astype(dtype)
    bias = (jnp.sum(A_b, axis=0) + jnp.sum(B_b, axis=0)).astype(jnp.float32)
    return W_A, W_B, bias.reshape(1, -1)


@functools.partial(jax.jit, static_argnames=("block_b",))
def multi_linear_ssm_forward(x, u, W_A, W_B, bias, *, block_b=8192):
    """
    x:    (B, state_order, state_dim)    f32 or bf16
    u:    (B, action_order, action_dim)  f32 or bf16
    W_A:  (state_order, state_dim, state_dim)   from pack_params
    W_B:  (action_order, action_dim, state_dim) from pack_params
    bias: (1, state_dim) f32                    from pack_params
    returns: (B, state_dim) float32
    """
    B, SO, SD = x.shape
    _, AO, AD = u.shape
    N = W_A.shape[-1]  # output state_dim

    # Batch tile: sublane multiple, capped by block_b (and by B itself).
    TB = _round_up(min(block_b, B), _SUBLANE)
    grid = (pl.cdiv(B, TB),)

    return pl.pallas_call(
        _ssm_kernel,
        out_shape=jax.ShapeDtypeStruct((B, N), jnp.float32),
        grid=grid,
        in_specs=[
            # Streamed (double-buffered) batch tiles; trailing block dims equal
            # the full array dims, so no (8,128) padding is needed.
            pl.BlockSpec((TB, SO, SD), lambda i: (i, 0, 0)),
            pl.BlockSpec((TB, AO, AD), lambda i: (i, 0, 0)),
            # Weights & bias: constant index_map -> VMEM-resident across steps.
            # TODO(synk): pipeline_mode=pl.Buffered(1) would drop their double
            # buffer; savings are negligible (<0.1 MiB) at these sizes.
            pl.BlockSpec((SO, SD, N), lambda i: (0, 0, 0)),
            pl.BlockSpec((AO, AD, N), lambda i: (0, 0, 0)),
            pl.BlockSpec((1, N), lambda i: (0, 0)),
        ],
        out_specs=pl.BlockSpec((TB, N), lambda i: (i, 0)),
        compiler_params=pltpu.CompilerParams(
            # TODO(synk): on v7x consider pltpu.CORE_PARALLEL (or an explicit
            # core_map) to guarantee both TensorCores stream disjoint halves.
            dimension_semantics=(pltpu.PARALLEL,),
            vmem_limit_bytes=_vmem_limit_bytes(),
        ),
    )(x, u, W_A, W_B, bias)


def _init_params(key, state_dim, action_dim, state_order, action_order):
    """Deterministic init mimicking nn.Linear default (uniform +/- 1/sqrt(fan_in))."""
    ks = jax.random.split(key, 4)
    a_bound = 1.0 / np.sqrt(state_dim)
    b_bound = 1.0 / np.sqrt(action_dim)
    A_w = jax.random.uniform(ks[0], (state_order, state_dim, state_dim),
                             jnp.float32, -a_bound, a_bound)
    A_b = jax.random.uniform(ks[1], (state_order, state_dim),
                             jnp.float32, -a_bound, a_bound)
    B_w = jax.random.uniform(ks[2], (action_order, state_dim, action_dim),
                             jnp.float32, -b_bound, b_bound)
    B_b = jax.random.uniform(ks[3], (action_order, state_dim),
                             jnp.float32, -b_bound, b_bound)
    return A_w, A_b, B_w, B_b


def _reference(x, u, A_w, A_b, B_w, B_b):
    # Pure-JAX reference matching the PyTorch loop exactly.
    res = 0.0
    for i in range(A_w.shape[0]):
        res = res + x[:, i, :] @ A_w[i].T + A_b[i]
    for j in range(B_w.shape[0]):
        res = res + u[:, j, :] @ B_w[j].T + B_b[j]
    return res


if __name__ == "__main__":
    B = 8
    state_dim = 32
    action_dim = 16
    state_order = 3
    action_order = 2

    key = jax.random.PRNGKey(0)
    k_param, k_x, k_u = jax.random.split(key, 3)

    A_w, A_b, B_w, B_b = _init_params(k_param, state_dim, action_dim,
                                      state_order, action_order)
    x = jax.random.normal(k_x, (B, state_order, state_dim), jnp.float32)
    u = jax.random.normal(k_u, (B, action_order, action_dim), jnp.float32)

    ref = _reference(x, u, A_w, A_b, B_w, B_b)

    # --- f32 path (matches PyTorch numerics) ------------------------------
    W_A, W_B, bias = pack_params(A_w, A_b, B_w, B_b, dtype=jnp.float32)
    W_A, W_B, bias = jax.block_until_ready((W_A, W_B, bias))
    out = jax.block_until_ready(multi_linear_ssm_forward(x, u, W_A, W_B, bias))
    np.testing.assert_allclose(np.asarray(out), np.asarray(ref),
                               rtol=1e-5, atol=1e-5)

    # --- bf16 activation path (half input HBM bytes, f32 accumulate) ------
    W_A16, W_B16, bias16 = pack_params(A_w, A_b, B_w, B_b, dtype=jnp.bfloat16)
    out16 = multi_linear_ssm_forward(x.astype(jnp.bfloat16),
                                     u.astype(jnp.bfloat16),
                                     W_A16, W_B16, bias16)
    out16 = jax.block_until_ready(out16)
    np.testing.assert_allclose(np.asarray(out16), np.asarray(ref),
                               rtol=3e-2, atol=3e-2)

    print("KERNEL_OK")
</pallas_src>

<mosaic_0001>
module attributes {stable_mosaic.version = 11 : i64} {
  func.func @_ssm_kernel(%arg0: i32, %arg1: memref<8x3x32xf32, #tpu.memory_space<vmem>>, %arg2: memref<8x2x16xf32, #tpu.memory_space<vmem>>, %arg3: memref<3x32x32xf32, #tpu.memory_space<vmem>>, %arg4: memref<2x16x32xf32, #tpu.memory_space<vmem>>, %arg5: memref<1x32xf32, #tpu.memory_space<vmem>>, %arg6: memref<8x32xf32, #tpu.memory_space<vmem>>) attributes {dimension_semantics = [#tpu.dimension_semantics<parallel>], iteration_bounds = array<i64: 1>, scalar_prefetch = 0 : i64, scratch_operands = 0 : i64, tpu.core_type = #tpu.core_type<tc>, window_params = [{transform_indices = @transform_0, window_bounds = array<i64: 8, 3, 32>}, {transform_indices = @transform_1, window_bounds = array<i64: 8, 2, 16>}, {pipeline_mode = #tpu.pipeline_mode<synchronous>, transform_indices = @transform_2, window_bounds = array<i64: 3, 32, 32>}, {pipeline_mode = #tpu.pipeline_mode<synchronous>, transform_indices = @transform_3, window_bounds = array<i64: 2, 16, 32>}, {pipeline_mode = #tpu.pipeline_mode<synchronous>, transform_indices = @transform_4, window_bounds = array<i64: 1, 32>}, {transform_indices = @transform_5, window_bounds = array<i64: 8, 32>}]} {
    %cst = arith.constant 0.000000e+00 : f32
    %0 = vector.broadcast %cst : f32 to vector<8x32xf32>
    %c0 = arith.constant 0 : index
    %c0_0 = arith.constant 0 : index
    %1 = vector.load %arg5[%c0, %c0_0] : memref<1x32xf32, #tpu.memory_space<vmem>>, vector<1x32xf32>
    %2 = vector.broadcast %1 : vector<1x32xf32> to vector<8x32xf32>
    %3 = arith.addf %0, %2 : vector<8x32xf32>
    %c0_1 = arith.constant 0 : index
    %c0_2 = arith.constant 0 : index
    %c0_3 = arith.constant 0 : index
    %4 = vector.load %arg1[%c0_1, %c0_2, %c0_3] : memref<8x3x32xf32, #tpu.memory_space<vmem>>, vector<8x1x32xf32>
    %5 = vector.shape_cast %4 : vector<8x1x32xf32> to vector<8x32xf32>
    %c0_4 = arith.constant 0 : index
    %c0_5 = arith.constant 0 : index
    %c0_6 = arith.constant 0 : index
    %6 = vector.load %arg3[%c0_4, %c0_5, %c0_6] : memref<3x32x32xf32, #tpu.memory_space<vmem>>, vector<1x32x32xf32>
    %7 = vector.shape_cast %6 : vector<1x32x32xf32> to vector<32x32xf32>
    %cst_7 = arith.constant dense<0.000000e+00> : vector<8x32xf32>
    %8 = tpu.matmul %5, %7, %cst_7 {dimension_numbers = #tpu.dot_dimension_numbers<[1], [0], [0], [1], [0, 0, 1, 1], [], []>} : vector<8x32xf32>, vector<32x32xf32>, vector<8x32xf32> -> vector<8x32xf32>
    %9 = arith.addf %3, %8 : vector<8x32xf32>
    %c0_8 = arith.constant 0 : index
    %c1 = arith.constant 1 : index
    %c0_9 = arith.constant 0 : index
    %10 = vector.load %arg1[%c0_8, %c1, %c0_9] : memref<8x3x32xf32, #tpu.memory_space<vmem>>, vector<8x1x32xf32>
    %11 = vector.shape_cast %10 : vector<8x1x32xf32> to vector<8x32xf32>
    %c1_10 = arith.constant 1 : index
    %c0_11 = arith.constant 0 : index
    %c0_12 = arith.constant 0 : index
    %12 = vector.load %arg3[%c1_10, %c0_11, %c0_12] : memref<3x32x32xf32, #tpu.memory_space<vmem>>, vector<1x32x32xf32>
    %13 = vector.shape_cast %12 : vector<1x32x32xf32> to vector<32x32xf32>
    %cst_13 = arith.constant dense<0.000000e+00> : vector<8x32xf32>
    %14 = tpu.matmul %11, %13, %cst_13 {dimension_numbers = #tpu.dot_dimension_numbers<[1], [0], [0], [1], [0, 0, 1, 1], [], []>} : vector<8x32xf32>, vector<32x32xf32>, vector<8x32xf32> -> vector<8x32xf32>
    %15 = arith.addf %9, %14 : vector<8x32xf32>
    %c0_14 = arith.constant 0 : index
    %c2 = arith.constant 2 : index
    %c0_15 = arith.constant 0 : index
    %16 = vector.load %arg1[%c0_14, %c2, %c0_15] : memref<8x3x32xf32, #tpu.memory_space<vmem>>, vector<8x1x32xf32>
    %17 = vector.shape_cast %16 : vector<8x1x32xf32> to vector<8x32xf32>
    %c2_16 = arith.constant 2 : index
    %c0_17 = arith.constant 0 : index
    %c0_18 = arith.constant 0 : index
    %18 = vector.load %arg3[%c2_16, %c0_17, %c0_18] : memref<3x32x32xf32, #tpu.memory_space<vmem>>, vector<1x32x32xf32>
    %19 = vector.shape_cast %18 : vector<1x32x32xf32> to vector<32x32xf32>
    %cst_19 = arith.constant dense<0.000000e+00> : vector<8x32xf32>
    %20 = tpu.matmul %17, %19, %cst_19 {dimension_numbers = #tpu.dot_dimension_numbers<[1], [0], [0], [1], [0, 0, 1, 1], [], []>} : vector<8x32xf32>, vector<32x32xf32>, vector<8x32xf32> -> vector<8x32xf32>
    %21 = arith.addf %15, %20 : vector<8x32xf32>
    %c0_20 = arith.constant 0 : index
    %c0_21 = arith.constant 0 : index
    %c0_22 = arith.constant 0 : index
    %22 = vector.load %arg2[%c0_20, %c0_21, %c0_22] : memref<8x2x16xf32, #tpu.memory_space<vmem>>, vector<8x1x16xf32>
    %23 = vector.shape_cast %22 : vector<8x1x16xf32> to vector<8x16xf32>
    %c0_23 = arith.constant 0 : index
    %c0_24 = arith.constant 0 : index
    %c0_25 = arith.constant 0 : index
    %24 = vector.load %arg4[%c0_23, %c0_24, %c0_25] : memref<2x16x32xf32, #tpu.memory_space<vmem>>, vector<1x16x32xf32>
    %25 = vector.shape_cast %24 : vector<1x16x32xf32> to vector<16x32xf32>
    %cst_26 = arith.constant dense<0.000000e+00> : vector<8x32xf32>
    %26 = tpu.matmul %23, %25, %cst_26 {dimension_numbers = #tpu.dot_dimension_numbers<[1], [0], [0], [1], [0, 0, 1, 1], [], []>} : vector<8x16xf32>, vector<16x32xf32>, vector<8x32xf32> -> vector<8x32xf32>
    %27 = arith.addf %21, %26 : vector<8x32xf32>
    %c0_27 = arith.constant 0 : index
    %c1_28 = arith.constant 1 : index
    %c0_29 = arith.constant 0 : index
    %28 = vector.load %arg2[%c0_27, %c1_28, %c0_29] : memref<8x2x16xf32, #tpu.memory_space<vmem>>, vector<8x1x16xf32>
    %29 = vector.shape_cast %28 : vector<8x1x16xf32> to vector<8x16xf32>
    %c1_30 = arith.constant 1 : index
    %c0_31 = arith.constant 0 : index
    %c0_32 = arith.constant 0 : index
    %30 = vector.load %arg4[%c1_30, %c0_31, %c0_32] : memref<2x16x32xf32, #tpu.memory_space<vmem>>, vector<1x16x32xf32>
    %31 = vector.shape_cast %30 : vector<1x16x32xf32> to vector<16x32xf32>
    %cst_33 = arith.constant dense<0.000000e+00> : vector<8x32xf32>
    %32 = tpu.matmul %29, %31, %cst_33 {dimension_numbers = #tpu.dot_dimension_numbers<[1], [0], [0], [1], [0, 0, 1, 1], [], []>} : vector<8x16xf32>, vector<16x32xf32>, vector<8x32xf32> -> vector<8x32xf32>
    %33 = arith.addf %27, %32 : vector<8x32xf32>
    %c0_34 = arith.constant 0 : index
    %c0_35 = arith.constant 0 : index
    %34 = vector.load %arg6[%c0_34, %c0_35] : memref<8x32xf32, #tpu.memory_space<vmem>>, vector<8x32xf32>
    tpu.vector_store %arg6[%c0_34, %c0_35], %33 {strides = array<i32>} : memref<8x32xf32, #tpu.memory_space<vmem>>, vector<8x32xf32>,
    return
  }
  func.func @transform_0(%arg0: i32) -> (i32, i32, i32) {
    %c0_i32 = arith.constant 0 : i32
    %c0_i32_0 = arith.constant 0 : i32
    %c0_i32_1 = arith.constant 0 : i32
    return %arg0, %c0_i32, %c0_i32_0 : i32, i32, i32
  }
  func.func @transform_1(%arg0: i32) -> (i32, i32, i32) {
    %c0_i32 = arith.constant 0 : i32
    %c0_i32_0 = arith.constant 0 : i32
    %c0_i32_1 = arith.constant 0 : i32
    return %arg0, %c0_i32, %c0_i32_0 : i32, i32, i32
  }
  func.func @transform_2(%arg0: i32) -> (i32, i32, i32) {
    %c0_i32 = arith.constant 0 : i32
    %c0_i32_0 = arith.constant 0 : i32
    %c0_i32_1 = arith.constant 0 : i32
    %c0_i32_2 = arith.constant 0 : i32
    return %c0_i32, %c0_i32_0, %c0_i32_1 : i32, i32, i32
  }
  func.func @transform_3(%arg0: i32) -> (i32, i32, i32) {
    %c0_i32 = arith.constant 0 : i32
    %c0_i32_0 = arith.constant 0 : i32
    %c0_i32_1 = arith.constant 0 : i32
    %c0_i32_2 = arith.constant 0 : i32
    return %c0_i32, %c0_i32_0, %c0_i32_1 : i32, i32, i32
  }
  func.func @transform_4(%arg0: i32) -> (i32, i32) {
    %c0_i32 = arith.constant 0 : i32
    %c0_i32_0 = arith.constant 0 : i32
    %c0_i32_1 = arith.constant 0 : i32
    return %c0_i32, %c0_i32_0 : i32, i32
  }
  func.func @transform_5(%arg0: i32) -> (i32, i32) {
    %c0_i32 = arith.constant 0 : i32
    %c0_i32_0 = arith.constant 0 : i32
    return %arg0, %c0_i32 : i32, i32
  }
}

</mosaic_0001>

<llo_original>
// kernel: multi_linear_ssm_forward.1
$region0: #{multi_linear_ssm_forward.1}
  #allocation0 [shape = 'u32[]', space=smem, size = 0x4, offset = 0x4, fixed_abs, tag = 'smem constant byte address 0x4 - core index']
  #allocation1 [shape = 'u32[144,128]{1,0:T(1,128)}', space=vmem, size = 0x12000, scoped, tag = 'internal scratch']
  %s0 = inlined_call_operand.hbm [shape: f32[8,3,32], index: 0, kind: input, shape index: {}]
  %s1 = inlined_call_operand.hbm [shape: f32[8,2,16], index: 1, kind: input, shape index: {}]
  %s2 = inlined_call_operand.hbm [shape: f32[3,32,32], index: 2, kind: input, shape index: {}]
  %s3 = inlined_call_operand.hbm [shape: f32[2,16,32], index: 3, kind: input, shape index: {}]
  %s4 = inlined_call_operand.hbm [shape: f32[1,32], index: 4, kind: input, shape index: {}]
  %s5 = inlined_call_operand.hbm [shape: f32[8,32], index: 5, kind: output, shape index: {}]
  %s6 = sld [smem:[#allocation0]]
  $region50: #{multi_linear_ssm_forward.1} parent=0
    _
  %s8 = ssub.s32 1, %s6
  %s9 = scalar_select 0, %s8, %s6
  $region1: #{multi_linear_ssm_forward.1} parent=0
    #allocation2 [shape = 'u8[16384]{0}', space=vmem, size = 0x4000, scoped, tag = 'input window, operand 0, single buffered']
    #allocation3 [shape = 's32[1]{0}', space=sflag, size = 0x4, scoped, tag = 'scoped memory for multi_linear_ssm_forward.1']
    #allocation4 [shape = 's32[1]{0}', space=sflag, size = 0x4, scoped, tag = 'scoped memory for multi_linear_ssm_forward.1']
    #allocation5 [shape = 'u8[8192]{0}', space=vmem, size = 0x2000, scoped, tag = 'input window, operand 1, single buffered']
    #allocation6 [shape = 's32[1]{0}', space=sflag, size = 0x4, scoped, tag = 'scoped memory for multi_linear_ssm_forward.1']
    #allocation7 [shape = 'u8[49152]{0}', space=vmem, size = 0xc000, scoped, tag = 'input window, operand 2, single buffered']
    #allocation8 [shape = 'u8[16384]{0}', space=vmem, size = 0x4000, scoped, tag = 'input window, operand 3, single buffered']
    #allocation9 [shape = 's32[1]{0}', space=sflag, size = 0x4, scoped, tag = 'scoped memory for multi_linear_ssm_forward.1']
    #allocation10 [shape = 'u8[512]{0}', space=vmem, size = 0x400, scoped, tag = 'input window, operand 4, single buffered']
    #allocation11 [shape = 'u8[4096]{0}', space=vmem, size = 0x1000, scoped, tag = 'output window, operand 0, single buffered']
    %10 = vsyncpa [#allocation3], 0
    %11 = vsyncpa [#allocation6], 0
    %12 = vsyncpa [#allocation9], 0
    %13 = vsyncpa [#allocation4], 0
    // Predicated region
    $region2: #{multi_linear_ssm_forward.1} parent=1 // pred_check
      _
    $region3: #{multi_linear_ssm_forward.1} parent=1 // pred_check_branch
      %15 = sbr.rel (0) target = $region5
    $region4: #{multi_linear_ssm_forward.1} parent=1 // pred_region
      %s17 = ssub.s32 512, 512
      %18 = vsyncadd [#allocation3], %s17
      %s19 = sshll.u32 [#allocation2], 4
      %s20 = int_to_ptr.vmem [resolvable:$true] %s19
      %25 = dma.hbm_to_vmem [thread:$0]  %s0, 512, %s20, [#allocation3], 64, 64, 4
    $region5: #{multi_linear_ssm_forward.1} parent=1 // pred_fallthru
      _
    // Predicated region
    $region6: #{multi_linear_ssm_forward.1} parent=1 // pred_check
      _
    $region7: #{multi_linear_ssm_forward.1} parent=1 // pred_check_branch
      %27 = sbr.rel (0) target = $region9
    $region8: #{multi_linear_ssm_forward.1} parent=1 // pred_region
      %s29 = ssub.s32 256, 256
      %30 = vsyncadd [#allocation6], %s29
      %s31 = sshll.u32 [#allocation5], 4
      %s32 = int_to_ptr.vmem [resolvable:$true] %s31
      %37 = dma.hbm_to_vmem [thread:$0]  %s1, 256, %s32, [#allocation6], 32, 32, 2
    $region9: #{multi_linear_ssm_forward.1} parent=1 // pred_fallthru
      _
    // Predicated region
    $region10: #{multi_linear_ssm_forward.1} parent=1 // pred_check
      _
    $region11: #{multi_linear_ssm_forward.1} parent=1 // pred_check_branch
      %39 = sbr.rel (0) target = $region13
    $region12: #{multi_linear_ssm_forward.1} parent=1 // pred_region
      %s41 = ssub.s32 1536, 1536
      %42 = vsyncadd [#allocation6], %s41
      %s43 = sshll.u32 [#allocation7], 4
      %s44 = int_to_ptr.vmem [resolvable:$true] %s43
      %49 = dma.hbm_to_vmem [thread:$0]  %s2, 1536, %s44, [#allocation6], 128, 128, 8
    $region13: #{multi_linear_ssm_forward.1} parent=1 // pred_fallthru
      _
    // Predicated region
    $region14: #{multi_linear_ssm_forward.1} parent=1 // pred_check
      _
    $region15: #{multi_linear_ssm_forward.1} parent=1 // pred_check_branch
      %51 = sbr.rel (0) target = $region17
    $region16: #{multi_linear_ssm_forward.1} parent=1 // pred_region
      %s53 = ssub.s32 512, 512
      %54 = vsyncadd [#allocation9], %s53
      %s55 = sshll.u32 [#allocation8], 4
      %s56 = int_to_ptr.vmem [resolvable:$true] %s55
      %61 = dma.hbm_to_vmem [thread:$0]  %s3, 512, %s56, [#allocation9], 128, 128, 8
    $region17: #{multi_linear_ssm_forward.1} parent=1 // pred_fallthru
      _
    // Predicated region
    $region18: #{multi_linear_ssm_forward.1} parent=1 // pred_check
      _
    $region19: #{multi_linear_ssm_forward.1} parent=1 // pred_check_branch
      %63 = sbr.rel (0) target = $region21
    $region20: #{multi_linear_ssm_forward.1} parent=1 // pred_region
      %s65 = ssub.s32 16, 16
      %66 = vsyncadd [#allocation9], %s65
      %s68 = sshll.u32 [#allocation10], 4
      %s69 = int_to_ptr.vmem [resolvable:$true] %s68
      %71 = dma.hbm_to_vmem [thread:$0]  %s4, 16, %s69, [#allocation9]
    $region21: #{multi_linear_ssm_forward.1} parent=1 // pred_fallthru
      _
    // Predicated region
    $region22: #{multi_linear_ssm_forward.1} parent=1 // pred_check
      _
    $region23: #{multi_linear_ssm_forward.1} parent=1 // pred_check_branch
      %73 = sbr.rel (0) target = $region25
    $region24: #{multi_linear_ssm_forward.1} parent=1 // pred_region
      %74 = dma.done [#allocation3], 512
    $region25: #{multi_linear_ssm_forward.1} parent=1 // pred_fallthru
      _
    // Predicated region
    $region26: #{multi_linear_ssm_forward.1} parent=1 // pred_check
      _
    $region27: #{multi_linear_ssm_forward.1} parent=1 // pred_check_branch
      %76 = sbr.rel (0) target = $region29
    $region28: #{multi_linear_ssm_forward.1} parent=1 // pred_region
      %77 = dma.done [#allocation6], 256
    $region29: #{multi_linear_ssm_forward.1} parent=1 // pred_fallthru
      _
    // Predicated region
    $region30: #{multi_linear_ssm_forward.1} parent=1 // pred_check
      _
    $region31: #{multi_linear_ssm_forward.1} parent=1 // pred_check_branch
      %79 = sbr.rel (0) target = $region33
    $region32: #{multi_linear_ssm_forward.1} parent=1 // pred_region
      %80 = dma.done [#allocation6], 1536
    $region33: #{multi_linear_ssm_forward.1} parent=1 // pred_fallthru
      _
    // Predicated region
    $region34: #{multi_linear_ssm_forward.1} parent=1 // pred_check
      _
    $region35: #{multi_linear_ssm_forward.1} parent=1 // pred_check_branch
      %82 = sbr.rel (0) target = $region37
    $region36: #{multi_linear_ssm_forward.1} parent=1 // pred_region
      %83 = dma.done [#allocation9], 512
    $region37: #{multi_linear_ssm_forward.1} parent=1 // pred_fallthru
      _
    // Predicated region
    $region38: #{multi_linear_ssm_forward.1} parent=1 // pred_check
      _
    $region39: #{multi_linear_ssm_forward.1} parent=1 // pred_check_branch
      %85 = sbr.rel (0) target = $region41
    $region40: #{multi_linear_ssm_forward.1} parent=1 // pred_region
      %86 = dma.done [#allocation9], 16
    $region41: #{multi_linear_ssm_forward.1} parent=1 // pred_fallthru
      _
    %v87 = vld [vmem:[#allocation10] sm:$0x1]
    %v89 = vlaneseq
    %v90 = vshrl.u32 %v89, 7
    %v91 = vsub.s32 0, %v90
    %v92 = vrot.slane %v87, %v91
    %v94 = vadd.f32 %v92, 0.0
    %v95 = vld [vmem:[#allocation2] sm:$0x1]
    %v96 = vld [vmem:[#allocation2 + $0x4] sm:$0x1]
    %v97 = vld [vmem:[#allocation2 + $0x8] sm:$0x1]
    %v98 = vld [vmem:[#allocation2 + $0xc] sm:$0x1]
    %v99 = vld [vmem:[#allocation2 + $0x10] sm:$0x1]
    %v100 = vld [vmem:[#allocation2 + $0x14] sm:$0x1]
    %v101 = vld [vmem:[#allocation2 + $0x18] sm:$0x1]
    %v102 = vld [vmem:[#allocation2 + $0x1c] sm:$0x1]
    %v103 = vld [vmem:[#allocation7] sm:$0xff]
    %v104 = vld [vmem:[#allocation7 + $0x8] sm:$0xff]
    %v105 = vld [vmem:[#allocation7 + $0x10] sm:$0xff]
    %v106 = vld [vmem:[#allocation7 + $0x18] sm:$0xff]
    %v115 = vrot.slane %v96, 7
    %vm116 = vcmask 1041409
    %v117 = vsel %vm116, %v115, %v95
    %v118 = vrot.slane %v97, 6
    %vm119 = vcmask 1042434
    %v120 = vsel %vm119, %v118, %v117
    %v121 = vrot.slane %v98, 5
    %vm122 = vcmask 1043459
    %v123 = vsel %vm122, %v121, %v120
    %v124 = vrot.slane %v99, 4
    %vm125 = vcmask 1044484
    %v126 = vsel %vm125, %v124, %v123
    %v127 = vrot.slane %v100, 3
    %vm128 = vcmask 1045509
    %v129 = vsel %vm128, %v127, %v126
    %v130 = vrot.slane %v101, 2
    %vm131 = vcmask 1046534
    %v132 = vsel %vm131, %v130, %v129
    %v133 = vrot.slane %v102, 1
    %vm134 = vcmask 1047559
    %v135 = vsel %vm134, %v133, %v132
    %vm136 = vcmask 261120
    %v137 = vsel %vm136, %v135, 0
    %139 = vmatprep.subr.mxu0 0.0
    %140 = vmatpush1.msra.mxu0 %v103
    %141 = vmatprep.subr.mxu0 0.0
    %142 = vmatpush1.msra.mxu0 %v104
    %143 = vmatprep.subr.mxu0 0.0
    %144 = vmatpush1.msra.mxu0 %v105
    %145 = vmatprep.subr.mxu0 0.0
    %146 = vmatpush1.msra.mxu0 %v106
    %147 = vmatprep.subr.mxu0 0.0
    %148 = vmatpush1.msra.mxu0 0.0
    %149 = vmatprep.subr.mxu0 0.0
    %150 = vmatpush1.msra.mxu0 0.0
    %151 = vmatprep.subr.mxu0 0.0
    %152 = vmatpush1.msra.mxu0 0.0
    %153 = vmatprep.subr.mxu0 0.0
    %154 = vmatpush1.msra.mxu0 0.0
    %155 = vmatprep.subr.mxu0 0.0
    %156 = vmatpush1.msra.mxu0 0.0
    %157 = vmatprep.subr.mxu0 0.0
    %158 = vmatpush1.msra.mxu0 0.0
    %159 = vmatprep.subr.mxu0 0.0
    %160 = vmatpush1.msra.mxu0 0.0
    %161 = vmatprep.subr.mxu0 0.0
    %162 = vmatpush1.msra.mxu0 0.0
    %163 = vmatprep.subr.mxu0 0.0
    %164 = vmatpush1.msra.mxu0 0.0
    %165 = vmatprep.subr.mxu0 0.0
    %166 = vmatpush1.msra.mxu0 0.0
    %167 = vmatprep.subr.mxu0 0.0
    %168 = vmatpush1.msra.mxu0 0.0
    %169 = vmatprep.subr.mxu0 0.0
    %170 = vmatpush1.msra.mxu0 0.0
    %171 = vmatprep.subr.mxu0 0.0
    %172 = vmatpush1.msra.mxu0 0.0
    %173 = vmatprep.subr.mxu0 0.0
    %174 = vmatpush1.msra.mxu0 0.0
    %175 = vmatprep.subr.mxu0 0.0
    %176 = vmatpush1.msra.mxu0 0.0
    %177 = vmatprep.subr.mxu0 0.0
    %178 = vmatpush1.msra.mxu0 0.0
    %179 = vmatprep.subr.mxu0 0.0
    %180 = vmatpush1.msra.mxu0 0.0
    %181 = vmatprep.subr.mxu0 0.0
    %182 = vmatpush1.msra.mxu0 0.0
    %183 = vmatprep.subr.mxu0 0.0
    %184 = vmatpush1.msra.mxu0 0.0
    %185 = vmatprep.subr.mxu0 0.0
    %186 = vmatpush1.msra.mxu0 0.0
    %187 = vmatprep.subr.mxu0 0.0
    %188 = vmatpush1.msra.mxu0 0.0
    %189 = vmatprep.subr.mxu0 0.0
    %190 = vmatpush1.msra.mxu0 0.0
    %191 = vmatprep.subr.mxu0 0.0
    %192 = vmatpush1.msra.mxu0 0.0
    %193 = vmatprep.subr.mxu0 0.0
    %194 = vmatpush1.msra.mxu0 0.0
    %195 = vmatprep.subr.mxu0 0.0
    %196 = vmatpush1.msra.mxu0 0.0
    %197 = vmatprep.subr.mxu0 0.0
    %198 = vmatpush1.msra.mxu0 0.0
    %199 = vmatprep.subr.mxu0 0.0
    %200 = vmatpush1.msra.mxu0 0.0
    %201 = vmatprep.subr.mxu0 0.0
    %202 = vmatpush1.msra.mxu0 0.0
    %203 = vmatprep.mubr.f32.mxu0 0.0
    %204 = vmatmul.mubr.f32.gmra.mrb[0].mxu0 %v137
    %v205 = vpop.f32.mrb[0].mxu0
    %v206 = vadd.f32 0.0, %v205
    %v207 = vpop.f32.mrb[0].mxu0
    %208 = vdwg.mxu0
    %v209 = vadd.f32 %v94, %v206
    %v210 = vld [vmem:[#allocation2 + $0x1] sm:$0x1]
    %v211 = vld [vmem:[#allocation2 + $0x5] sm:$0x1]
    %v212 = vld [vmem:[#allocation2 + $0x9] sm:$0x1]
    %v213 = vld [vmem:[#allocation2 + $0xd] sm:$0x1]
    %v214 = vld [vmem:[#allocation2 + $0x11] sm:$0x1]
    %v215 = vld [vmem:[#allocation2 + $0x15] sm:$0x1]
    %v216 = vld [vmem:[#allocation2 + $0x19] sm:$0x1]
    %v217 = vld [vmem:[#allocation2 + $0x1d] sm:$0x1]
    %s218 = scalar_lea.vmem [#allocation7], 32
    %v219 = vld [vmem:[%s218] sm:$0xff]
    %v220 = vld [vmem:[%s218 + $0x8] sm:$0xff]
    %v221 = vld [vmem:[%s218 + $0x10] sm:$0xff]
    %v222 = vld [vmem:[%s218 + $0x18] sm:$0xff]
    %v231 = vrot.slane %v211, 7
    %v232 = vsel %vm116, %v231, %v210
    %v233 = vrot.slane %v212, 6
    %v234 = vsel %vm119, %v233, %v232
    %v235 = vrot.slane %v213, 5
    %v236 = vsel %vm122, %v235, %v234
    %v237 = vrot.slane %v214, 4
    %v238 = vsel %vm125, %v237, %v236
    %v239 = vrot.slane %v215, 3
    %v240 = vsel %vm128, %v239, %v238
    %v241 = vrot.slane %v216, 2
    %v242 = vsel %vm131, %v241, %v240
    %v243 = vrot.slane %v217, 1
    %v244 = vsel %vm134, %v243, %v242
    %v245 = vsel %vm136, %v244, 0
    %247 = vmatprep.subr.mxu0 0.0
    %248 = vmatpush1.msra.mxu0 %v219
    %249 = vmatprep.subr.mxu0 0.0
    %250 = vmatpush1.msra.mxu0 %v220
    %251 = vmatprep.subr.mxu0 0.0
    %252 = vmatpush1.msra.mxu0 %v221
    %253 = vmatprep.subr.mxu0 0.0
    %254 = vmatpush1.msra.mxu0 %v222
    %255 = vmatprep.subr.mxu0 0.0
    %256 = vmatpush1.msra.mxu0 0.0
    %257 = vmatprep.subr.mxu0 0.0
    %258 = vmatpush1.msra.mxu0 0.0
    %259 = vmatprep.subr.mxu0 0.0
    %260 = vmatpush1.msra.mxu0 0.0
    %261 = vmatprep.subr.mxu0 0.0
    %262 = vmatpush1.msra.mxu0 0.0
    %263 = vmatprep.subr.mxu0 0.0
    %264 = vmatpush1.msra.mxu0 0.0
    %265 = vmatprep.subr.mxu0 0.0
    %266 = vmatpush1.msra.mxu0 0.0
    %267 = vmatprep.subr.mxu0 0.0
    %268 = vmatpush1.msra.mxu0 0.0
    %269 = vmatprep.subr.mxu0 0.0
    %270 = vmatpush1.msra.mxu0 0.0
    %271 = vmatprep.subr.mxu0 0.0
    %272 = vmatpush1.msra.mxu0 0.0
    %273 = vmatprep.subr.mxu0 0.0
    %274 = vmatpush1.msra.mxu0 0.0
    %275 = vmatprep.subr.mxu0 0.0
    %276 = vmatpush1.msra.mxu0 0.0
    %277 = vmatprep.subr.mxu0 0.0
    %278 = vmatpush1.msra.mxu0 0.0
    %279 = vmatprep.subr.mxu0 0.0
    %280 = vmatpush1.msra.mxu0 0.0
    %281 = vmatprep.subr.mxu0 0.0
    %282 = vmatpush1.msra.mxu0 0.0
    %283 = vmatprep.subr.mxu0 0.0
    %284 = vmatpush1.msra.mxu0 0.0
    %285 = vmatprep.subr.mxu0 0.0
    %286 = vmatpush1.msra.mxu0 0.0
    %287 = vmatprep.subr.mxu0 0.0
    %288 = vmatpush1.msra.mxu0 0.0
    %289 = vmatprep.subr.mxu0 0.0
    %290 = vmatpush1.msra.mxu0 0.0
    %291 = vmatprep.subr.mxu0 0.0
    %292 = vmatpush1.msra.mxu0 0.0
    %293 = vmatprep.subr.mxu0 0.0
    %294 = vmatpush1.msra.mxu0 0.0
    %295 = vmatprep.subr.mxu0 0.0
    %296 = vmatpush1.msra.mxu0 0.0
    %297 = vmatprep.subr.mxu0 0.0
    %298 = vmatpush1.msra.mxu0 0.0
    %299 = vmatprep.subr.mxu0 0.0
    %300 = vmatpush1.msra.mxu0 0.0
    %301 = vmatprep.subr.mxu0 0.0
    %302 = vmatpush1.msra.mxu0 0.0
    %303 = vmatprep.subr.mxu0 0.0
    %304 = vmatpush1.msra.mxu0 0.0
    %305 = vmatprep.subr.mxu0 0.0
    %306 = vmatpush1.msra.mxu0 0.0
    %307 = vmatprep.subr.mxu0 0.0
    %308 = vmatpush1.msra.mxu0 0.0
    %309 = vmatprep.subr.mxu0 0.0
    %310 = vmatpush1.msra.mxu0 0.0
    %311 = vmatprep.mubr.f32.mxu0 0.0
    %312 = vmatmul.mubr.f32.gmra.mrb[0].mxu0 %v245
    %v313 = vpop.f32.mrb[0].mxu0
    %v314 = vadd.f32 0.0, %v313
    %v315 = vpop.f32.mrb[0].mxu0
    %316 = vdwg.mxu0
    %v317 = vadd.f32 %v209, %v314
    %v318 = vld [vmem:[#allocation2 + $0x2] sm:$0x1]
    %v319 = vld [vmem:[#allocation2 + $0x6] sm:$0x1]
    %v320 = vld [vmem:[#allocation2 + $0xa] sm:$0x1]
    %v321 = vld [vmem:[#allocation2 + $0xe] sm:$0x1]
    %v322 = vld [vmem:[#allocation2 + $0x12] sm:$0x1]
    %v323 = vld [vmem:[#allocation2 + $0x16] sm:$0x1]
    %v324 = vld [vmem:[#allocation2 + $0x1a] sm:$0x1]
    %v325 = vld [vmem:[#allocation2 + $0x1e] sm:$0x1]
    %s326 = scalar_lea.vmem [#allocation7], 64
    %v327 = vld [vmem:[%s326] sm:$0xff]
    %v328 = vld [vmem:[%s326 + $0x8] sm:$0xff]
    %v329 = vld [vmem:[%s326 + $0x10] sm:$0xff]
    %v330 = vld [vmem:[%s326 + $0x18] sm:$0xff]
    %v339 = vrot.slane %v319, 7
    %v340 = vsel %vm116, %v339, %v318
    %v341 = vrot.slane %v320, 6
    %v342 = vsel %vm119, %v341, %v340
    %v343 = vrot.slane %v321, 5
    %v344 = vsel %vm122, %v343, %v342
    %v345 = vrot.slane %v322, 4
    %v346 = vsel %vm125, %v345, %v344
    %v347 = vrot.slane %v323, 3
    %v348 = vsel %vm128, %v347, %v346
    %v349 = vrot.slane %v324, 2
    %v350 = vsel %vm131, %v349, %v348
    %v351 = vrot.slane %v325, 1
    %v352 = vsel %vm134, %v351, %v350
    %v353 = vsel %vm136, %v352, 0
    %355 = vmatprep.subr.mxu0 0.0
    %356 = vmatpush1.msra.mxu0 %v327
    %357 = vmatprep.subr.mxu0 0.0
    %358 = vmatpush1.msra.mxu0 %v328
    %359 = vmatprep.subr.mxu0 0.0
    %360 = vmatpush1.msra.mxu0 %v329
    %361 = vmatprep.subr.mxu0 0.0
    %362 = vmatpush1.msra.mxu0 %v330
    %363 = vmatprep.subr.mxu0 0.0
    %364 = vmatpush1.msra.mxu0 0.0
    %365 = vmatprep.subr.mxu0 0.0
    %366 = vmatpush1.msra.mxu0 0.0
    %367 = vmatprep.subr.mxu0 0.0
    %368 = vmatpush1.msra.mxu0 0.0
    %369 = vmatprep.subr.mxu0 0.0
    %370 = vmatpush1.msra.mxu0 0.0
    %371 = vmatprep.subr.mxu0 0.0
    %372 = vmatpush1.msra.mxu0 0.0
    %373 = vmatprep.subr.mxu0 0.0
    %374 = vmatpush1.msra.mxu0 0.0
    %375 = vmatprep.subr.mxu0 0.0
    %376 = vmatpush1.msra.mxu0 0.0
    %377 = vmatprep.subr.mxu0 0.0
    %378 = vmatpush1.msra.mxu0 0.0
    %379 = vmatprep.subr.mxu0 0.0
    %380 = vmatpush1.msra.mxu0 0.0
    %381 = vmatprep.subr.mxu0 0.0
    %382 = vmatpush1.msra.mxu0 0.0
    %383 = vmatprep.subr.mxu0 0.0
    %384 = vmatpush1.msra.mxu0 0.0
    %385 = vmatprep.subr.mxu0 0.0
    %386 = vmatpush1.msra.mxu0 0.0
    %387 = vmatprep.subr.mxu0 0.0
    %388 = vmatpush1.msra.mxu0 0.0
    %389 = vmatprep.subr.mxu0 0.0
    %390 = vmatpush1.msra.mxu0 0.0
    %391 = vmatprep.subr.mxu0 0.0
    %392 = vmatpush1.msra.mxu0 0.0
    %393 = vmatprep.subr.mxu0 0.0
    %394 = vmatpush1.msra.mxu0 0.0
    %395 = vmatprep.subr.mxu0 0.0
    %396 = vmatpush1.msra.mxu0 0.0
    %397 = vmatprep.subr.mxu0 0.0
    %398 = vmatpush1.msra.mxu0 0.0
    %399 = vmatprep.subr.mxu0 0.0
    %400 = vmatpush1.msra.mxu0 0.0
    %401 = vmatprep.subr.mxu0 0.0
    %402 = vmatpush1.msra.mxu0 0.0
    %403 = vmatprep.subr.mxu0 0.0
    %404 = vmatpush1.msra.mxu0 0.0
    %405 = vmatprep.subr.mxu0 0.0
    %406 = vmatpush1.msra.mxu0 0.0
    %407 = vmatprep.subr.mxu0 0.0
    %408 = vmatpush1.msra.mxu0 0.0
    %409 = vmatprep.subr.mxu0 0.0
    %410 = vmatpush1.msra.mxu0 0.0
    %411 = vmatprep.subr.mxu0 0.0
    %412 = vmatpush1.msra.mxu0 0.0
    %413 = vmatprep.subr.mxu0 0.0
    %414 = vmatpush1.msra.mxu0 0.0
    %415 = vmatprep.subr.mxu0 0.0
    %416 = vmatpush1.msra.mxu0 0.0
    %417 = vmatprep.subr.mxu0 0.0
    %418 = vmatpush1.msra.mxu0 0.0
    %419 = vmatprep.mubr.f32.mxu0 0.0
    %420 = vmatmul.mubr.f32.gmra.mrb[0].mxu0 %v353
    %v421 = vpop.f32.mrb[0].mxu0
    %v422 = vadd.f32 0.0, %v421
    %v423 = vpop.f32.mrb[0].mxu0
    %424 = vdwg.mxu0
    %v425 = vadd.f32 %v317, %v422
    %v426 = vld [vmem:[#allocation5] sm:$0x1]
    %v427 = vld [vmem:[#allocation5 + $0x2] sm:$0x1]
    %v428 = vld [vmem:[#allocation5 + $0x4] sm:$0x1]
    %v429 = vld [vmem:[#allocation5 + $0x6] sm:$0x1]
    %v430 = vld [vmem:[#allocation5 + $0x8] sm:$0x1]
    %v431 = vld [vmem:[#allocation5 + $0xa] sm:$0x1]
    %v432 = vld [vmem:[#allocation5 + $0xc] sm:$0x1]
    %v433 = vld [vmem:[#allocation5 + $0xe] sm:$0x1]
    %v434 = vld [vmem:[#allocation8] sm:$0xff]
    %v435 = vld [vmem:[#allocation8 + $0x8] sm:$0xff]
    %v444 = vrot.slane %v427, 7
    %v445 = vsel %vm116, %v444, %v426
    %v446 = vrot.slane %v428, 6
    %v447 = vsel %vm119, %v446, %v445
    %v448 = vrot.slane %v429, 5
    %v449 = vsel %vm122, %v448, %v447
    %v450 = vrot.slane %v430, 4
    %v451 = vsel %vm125, %v450, %v449
    %v452 = vrot.slane %v431, 3
    %v453 = vsel %vm128, %v452, %v451
    %v454 = vrot.slane %v432, 2
    %v455 = vsel %vm131, %v454, %v453
    %v456 = vrot.slane %v433, 1
    %v457 = vsel %vm134, %v456, %v455
    %vm458 = vcmask 130048
    %v459 = vsel %vm458, %v457, 0
    %461 = vmatprep.subr.mxu0 0.0
    %462 = vmatpush1.msra.mxu0 %v434
    %463 = vmatprep.subr.mxu0 0.0
    %464 = vmatpush1.msra.mxu0 %v435
    %465 = vmatprep.subr.mxu0 0.0
    %466 = vmatpush1.msra.mxu0 0.0
    %467 = vmatprep.subr.mxu0 0.0
    %468 = vmatpush1.msra.mxu0 0.0
    %469 = vmatprep.subr.mxu0 0.0
    %470 = vmatpush1.msra.mxu0 0.0
    %471 = vmatprep.subr.mxu0 0.0
    %472 = vmatpush1.msra.mxu0 0.0
    %473 = vmatprep.subr.mxu0 0.0
    %474 = vmatpush1.msra.mxu0 0.0
    %475 = vmatprep.subr.mxu0 0.0
    %476 = vmatpush1.msra.mxu0 0.0
    %477 = vmatprep.subr.mxu0 0.0
    %478 = vmatpush1.msra.mxu0 0.0
    %479 = vmatprep.subr.mxu0 0.0
    %480 = vmatpush1.msra.mxu0 0.0
    %481 = vmatprep.subr.mxu0 0.0
    %482 = vmatpush1.msra.mxu0 0.0
    %483 = vmatprep.subr.mxu0 0.0
    %484 = vmatpush1.msra.mxu0 0.0
    %485 = vmatprep.subr.mxu0 0.0
    %486 = vmatpush1.msra.mxu0 0.0
    %487 = vmatprep.subr.mxu0 0.0
    %488 = vmatpush1.msra.mxu0 0.0
    %489 = vmatprep.subr.mxu0 0.0
    %490 = vmatpush1.msra.mxu0 0.0
    %491 = vmatprep.subr.mxu0 0.0
    %492 = vmatpush1.msra.mxu0 0.0
    %493 = vmatprep.subr.mxu0 0.0
    %494 = vmatpush1.msra.mxu0 0.0
    %495 = vmatprep.subr.mxu0 0.0
    %496 = vmatpush1.msra.mxu0 0.0
    %497 = vmatprep.subr.mxu0 0.0
    %498 = vmatpush1.msra.mxu0 0.0
    %499 = vmatprep.subr.mxu0 0.0
    %500 = vmatpush1.msra.mxu0 0.0
    %501 = vmatprep.subr.mxu0 0.0
    %502 = vmatpush1.msra.mxu0 0.0
    %503 = vmatprep.subr.mxu0 0.0
    %504 = vmatpush1.msra.mxu0 0.0
    %505 = vmatprep.subr.mxu0 0.0
    %506 = vmatpush1.msra.mxu0 0.0
    %507 = vmatprep.subr.mxu0 0.0
    %508 = vmatpush1.msra.mxu0 0.0
    %509 = vmatprep.subr.mxu0 0.0
    %510 = vmatpush1.msra.mxu0 0.0
    %511 = vmatprep.subr.mxu0 0.0
    %512 = vmatpush1.msra.mxu0 0.0
    %513 = vmatprep.subr.mxu0 0.0
    %514 = vmatpush1.msra.mxu0 0.0
    %515 = vmatprep.subr.mxu0 0.0
    %516 = vmatpush1.msra.mxu0 0.0
    %517 = vmatprep.subr.mxu0 0.0
    %518 = vmatpush1.msra.mxu0 0.0
    %519 = vmatprep.subr.mxu0 0.0
    %520 = vmatpush1.msra.mxu0 0.0
    %521 = vmatprep.subr.mxu0 0.0
    %522 = vmatpush1.msra.mxu0 0.0
    %523 = vmatprep.subr.mxu0 0.0
    %524 = vmatpush1.msra.mxu0 0.0
    %525 = vmatprep.mubr.f32.mxu0 0.0
    %526 = vmatmul.mubr.f32.gmra.mrb[0].mxu0 %v459
    %v527 = vpop.f32.mrb[0].mxu0
    %v528 = vadd.f32 0.0, %v527
    %v529 = vpop.f32.mrb[0].mxu0
    %530 = vdwg.mxu0
    %v531 = vadd.f32 %v425, %v528
    %v532 = vld [vmem:[#allocation5 + $0x1] sm:$0x1]
    %v533 = vld [vmem:[#allocation5 + $0x3] sm:$0x1]
    %v534 = vld [vmem:[#allocation5 + $0x5] sm:$0x1]
    %v535 = vld [vmem:[#allocation5 + $0x7] sm:$0x1]
    %v536 = vld [vmem:[#allocation5 + $0x9] sm:$0x1]
    %v537 = vld [vmem:[#allocation5 + $0xb] sm:$0x1]
    %v538 = vld [vmem:[#allocation5 + $0xd] sm:$0x1]
    %v539 = vld [vmem:[#allocation5 + $0xf] sm:$0x1]
    %s540 = scalar_lea.vmem [#allocation8], 16
    %v541 = vld [vmem:[%s540] sm:$0xff]
    %v542 = vld [vmem:[%s540 + $0x8] sm:$0xff]
    %v551 = vrot.slane %v533, 7
    %v552 = vsel %vm116, %v551, %v532
    %v553 = vrot.slane %v534, 6
    %v554 = vsel %vm119, %v553, %v552
    %v555 = vrot.slane %v535, 5
    %v556 = vsel %vm122, %v555, %v554
    %v557 = vrot.slane %v536, 4
    %v558 = vsel %vm125, %v557, %v556
    %v559 = vrot.slane %v537, 3
    %v560 = vsel %vm128, %v559, %v558
    %v561 = vrot.slane %v538, 2
    %v562 = vsel %vm131, %v561, %v560
    %v563 = vrot.slane %v539, 1
    %v564 = vsel %vm134, %v563, %v562
    %v565 = vsel %vm458, %v564, 0
    %567 = vmatprep.subr.mxu0 0.0
    %568 = vmatpush1.msra.mxu0 %v541
    %569 = vmatprep.subr.mxu0 0.0
    %570 = vmatpush1.msra.mxu0 %v542
    %571 = vmatprep.subr.mxu0 0.0
    %572 = vmatpush1.msra.mxu0 0.0
    %573 = vmatprep.subr.mxu0 0.0
    %574 = vmatpush1.msra.mxu0 0.0
    %575 = vmatprep.subr.mxu0 0.0
    %576 = vmatpush1.msra.mxu0 0.0
    %577 = vmatprep.subr.mxu0 0.0
    %578 = vmatpush1.msra.mxu0 0.0
    %579 = vmatprep.subr.mxu0 0.0
    %580 = vmatpush1.msra.mxu0 0.0
    %581 = vmatprep.subr.mxu0 0.0
    %582 = vmatpush1.msra.mxu0 0.0
    %583 = vmatprep.subr.mxu0 0.0
    %584 = vmatpush1.msra.mxu0 0.0
    %585 = vmatprep.subr.mxu0 0.0
    %586 = vmatpush1.msra.mxu0 0.0
    %587 = vmatprep.subr.mxu0 0.0
    %588 = vmatpush1.msra.mxu0 0.0
    %589 = vmatprep.subr.mxu0 0.0
    %590 = vmatpush1.msra.mxu0 0.0
    %591 = vmatprep.subr.mxu0 0.0
    %592 = vmatpush1.msra.mxu0 0.0
    %593 = vmatprep.subr.mxu0 0.0
    %594 = vmatpush1.msra.mxu0 0.0
    %595 = vmatprep.subr.mxu0 0.0
    %596 = vmatpush1.msra.mxu0 0.0
    %597 = vmatprep.subr.mxu0 0.0
    %598 = vmatpush1.msra.mxu0 0.0
    %599 = vmatprep.subr.mxu0 0.0
    %600 = vmatpush1.msra.mxu0 0.0
    %601 = vmatprep.subr.mxu0 0.0
    %602 = vmatpush1.msra.mxu0 0.0
    %603 = vmatprep.subr.mxu0 0.0
    %604 = vmatpush1.msra.mxu0 0.0
    %605 = vmatprep.subr.mxu0 0.0
    %606 = vmatpush1.msra.mxu0 0.0
    %607 = vmatprep.subr.mxu0 0.0
    %608 = vmatpush1.msra.mxu0 0.0
    %609 = vmatprep.subr.mxu0 0.0
    %610 = vmatpush1.msra.mxu0 0.0
    %611 = vmatprep.subr.mxu0 0.0
    %612 = vmatpush1.msra.mxu0 0.0
    %613 = vmatprep.subr.mxu0 0.0
    %614 = vmatpush1.msra.mxu0 0.0
    %615 = vmatprep.subr.mxu0 0.0
    %616 = vmatpush1.msra.mxu0 0.0
    %617 = vmatprep.subr.mxu0 0.0
    %618 = vmatpush1.msra.mxu0 0.0
    %619 = vmatprep.subr.mxu0 0.0
    %620 = vmatpush1.msra.mxu0 0.0
    %621 = vmatprep.subr.mxu0 0.0
    %622 = vmatpush1.msra.mxu0 0.0
    %623 = vmatprep.subr.mxu0 0.0
    %624 = vmatpush1.msra.mxu0 0.0
    %625 = vmatprep.subr.mxu0 0.0
    %626 = vmatpush1.msra.mxu0 0.0
    %627 = vmatprep.subr.mxu0 0.0
    %628 = vmatpush1.msra.mxu0 0.0
    %629 = vmatprep.subr.mxu0 0.0
    %630 = vmatpush1.msra.mxu0 0.0
    %631 = vmatprep.mubr.f32.mxu0 0.0
    %632 = vmatmul.mubr.f32.gmra.mrb[0].mxu0 %v565
    %v633 = vpop.f32.mrb[0].mxu0
    %v634 = vadd.f32 0.0, %v633
    %v635 = vpop.f32.mrb[0].mxu0
    %636 = vdwg.mxu0
    %v637 = vadd.f32 %v531, %v634
    %638 = vst.msk [vmem:[#allocation11] sm:$0xff] %vm136, %v637
    // Predicated region
    $region42: #{multi_linear_ssm_forward.1} parent=1 // pred_check
      _
    $region43: #{multi_linear_ssm_forward.1} parent=1 // pred_check_branch
      %640 = sbr.rel (0) target = $region45
    $region44: #{multi_linear_ssm_forward.1} parent=1 // pred_region
      %s642 = ssub.s32 128, 128
      %643 = vsyncadd [#allocation4], %s642
      %s645 = sshll.u32 [#allocation11], 4
      %s646 = int_to_ptr.vmem [resolvable:$true] %s645
      %648 = dma.vmem_to_hbm [thread:$0]  %s646, 128, %s5, [#allocation4]
    $region45: #{multi_linear_ssm_forward.1} parent=1 // pred_fallthru
      _
    // Predicated region
    $region46: #{multi_linear_ssm_forward.1} parent=1 // pred_check
      _
    $region47: #{multi_linear_ssm_forward.1} parent=1 // pred_check_branch
      %650 = sbr.rel (0) target = $region49
    $region48: #{multi_linear_ssm_forward.1} parent=1 // pred_region
      %651 = dma.done [#allocation4], 128
    $region49: #{multi_linear_ssm_forward.1} parent=1 // pred_fallthru
      _
    %652 = vsyncpa [#allocation3], 1
    %653 = vsyncpa [#allocation6], 1
    %654 = vsyncpa [#allocation9], 1
    %655 = vsyncpa [#allocation4], 1

</llo_original>
